<compile_context>
chip_gen: v6e
topology: v6e:2x2x1
jax: 0.10.0
libtpu: 0.0.40
codegen_flags: <defaults>
</compile_context>

<pallas_src>
import functools

import numpy as np
import jax
import jax.numpy as jnp
from jax.experimental import pallas as pl
from jax.experimental.pallas import tpu as pltpu


COUT = 20          # conv1 output channels (fixed by the module)
POOL_OUT = 7       # AdaptiveAvgPool2d output size
KP = 128           # lane-padded im2col contraction size (9 * Cin <= 128)
BN_EPS = 1e-5


# ---------------------------------------------------------------------------
# Kernel 1: conv3x3 (BN folded) + ReLU + maxpool 2x2 + adaptive avg-pool 7x7
# ---------------------------------------------------------------------------
def conv_pool_kernel(patches_ref, wk_ref, bk_ref, p2_ref, out_ref, *, n_win):
    # patches_ref: [1, 4*n_win, KP]  im2col rows, ordered ((dh*2+dw), hp, wp)
    # wk_ref     : [KP, COUT]        BN-folded conv weight (zero-padded rows)
    # bk_ref     : [1, COUT]         BN-folded bias
    # p2_ref     : [49, n_win]       adaptive-avg-pool matrix
    # out_ref    : [1, 49, COUT]
    x = patches_ref[0]                                           # [4*n_win, KP]
    acc = jnp.dot(x, wk_ref[...], preferred_element_type=jnp.float32)
    acc = jnp.maximum(acc + bk_ref[0, :], 0.0)                   # bias + ReLU (2D)
    # 2x2 max-pool: the four pixels of each window live in 4 contiguous blocks.
    q = n_win
    mp = jnp.maximum(jnp.maximum(acc[0:q], acc[q:2 * q]),
                     jnp.maximum(acc[2 * q:3 * q], acc[3 * q:4 * q]))  # [n_win, COUT]
    pooled = jnp.dot(p2_ref[...], mp, preferred_element_type=jnp.float32)  # [49, COUT]
    out_ref[...] = pooled[None].astype(out_ref.dtype)


# ---------------------------------------------------------------------------
# Kernel 2: Linear(980 -> class_num) + LogSoftmax
# ---------------------------------------------------------------------------
def mlp_logsoftmax_kernel(x_ref, w_ref, b_ref, o_ref):
    x = x_ref[...]                                               # [B, 980]
    logits = jnp.dot(x, w_ref[...], preferred_element_type=jnp.float32) + b_ref[0, :]
    m = jnp.max(logits, axis=-1, keepdims=True)
    z = logits - m
    lse = jnp.log(jnp.sum(jnp.exp(z), axis=-1, keepdims=True))
    o_ref[...] = (z - lse).astype(o_ref.dtype)


# ---------------------------------------------------------------------------
# Wrapper
# ---------------------------------------------------------------------------
def _adaptive_pool_matrix(hp, wp):
    """[49, hp*wp] matrix implementing AdaptiveAvgPool2d((7, 7))."""
    ph = np.zeros((hp, POOL_OUT), np.float32)
    for i in range(POOL_OUT):
        s, e = (i * hp) // POOL_OUT, ((i + 1) * hp + POOL_OUT - 1) // POOL_OUT
        ph[s:e, i] = 1.0 / (e - s)
    pw = np.zeros((wp, POOL_OUT), np.float32)
    for j in range(POOL_OUT):
        s, e = (j * wp) // POOL_OUT, ((j + 1) * wp + POOL_OUT - 1) // POOL_OUT
        pw[s:e, j] = 1.0 / (e - s)
    p2 = np.einsum("hi,wj->ijhw", ph, pw).reshape(POOL_OUT * POOL_OUT, hp * wp)
    return jnp.asarray(p2)


def cnn_v5_forward(x_nchw, params):
    """x_nchw: [B, Cin, H, W] float32 -> log-probs [B, class_num]."""
    B, Cin, H, W = x_nchw.shape
    Hp, Wp = H // 2, W // 2                   # MaxPool2d(2, 2) floors odd sizes
    n_win = Hp * Wp
    ncls = params["mlp_w"].shape[0]
    assert 9 * Cin <= KP and Hp >= 1 and Wp >= 1

    # --- fold BatchNorm (inference stats) into the conv weight / bias -------
    scale = params["bn_gamma"] / jnp.sqrt(params["bn_var"] + BN_EPS)          # [COUT]
    w_fold = params["conv_w"] * scale[:, None, None, None]                    # [O,I,3,3]
    b_fold = (params["conv_b"] - params["bn_mean"]) * scale + params["bn_beta"]
    wk = jnp.transpose(w_fold, (2, 3, 1, 0)).reshape(9 * Cin, COUT)           # (kh,kw,ci)->o
    wk = jnp.pad(wk, ((0, KP - 9 * Cin), (0, 0)))                             # pad K to 128
    bk = b_fold.reshape(1, COUT)

    # --- im2col (wrapper-side XLA glue), rows ordered ((dh,dw), hp, wp) ------
    x_nhwc = jnp.transpose(x_nchw, (0, 2, 3, 1))                              # [B,H,W,Cin]
    x_pad = jnp.pad(x_nhwc, ((0, 0), (1, 1), (1, 1), (0, 0)))
    taps = [x_pad[:, kh:kh + H, kw:kw + W, :] for kh in range(3) for kw in range(3)]
    patches = jnp.stack(taps, axis=3).reshape(B, H, W, 9 * Cin)               # (kh,kw,ci)
    patches = patches[:, :2 * Hp, :2 * Wp, :]                                 # maxpool crop
    patches = patches.reshape(B, Hp, 2, Wp, 2, 9 * Cin)
    patches = jnp.transpose(patches, (0, 2, 4, 1, 3, 5))                      # [B,dh,dw,hp,wp,k]
    patches = patches.reshape(B, 4 * n_win, 9 * Cin)
    patches = jnp.pad(patches, ((0, 0), (0, 0), (0, KP - 9 * Cin)))           # lane-dense K

    p2 = _adaptive_pool_matrix(Hp, Wp)                                        # [49, n_win]

    # --- fused conv + ReLU + maxpool + adaptive avg-pool (grid over batch) ---
    pooled = pl.pallas_call(
        functools.partial(conv_pool_kernel, n_win=n_win),
        out_shape=jax.ShapeDtypeStruct((B, POOL_OUT * POOL_OUT, COUT), jnp.float32),
        grid=(B,),
        in_specs=[
            pl.BlockSpec((1, 4 * n_win, KP), lambda b: (b, 0, 0)),
            pl.BlockSpec((KP, COUT), lambda b: (0, 0)),
            pl.BlockSpec((1, COUT), lambda b: (0, 0)),
            pl.BlockSpec((POOL_OUT * POOL_OUT, n_win), lambda b: (0, 0)),
        ],
        out_specs=pl.BlockSpec((1, POOL_OUT * POOL_OUT, COUT), lambda b: (b, 0, 0)),
        compiler_params=pltpu.CompilerParams(dimension_semantics=("parallel",)),
    )(patches, wk, bk, p2)

    # Flatten in (i, j, c) order; permute the PyTorch (c, i, j) MLP weight once.
    flat = pooled.reshape(B, POOL_OUT * POOL_OUT * COUT)                      # [B, 980]
    w2 = jnp.transpose(params["mlp_w"].reshape(ncls, COUT, POOL_OUT, POOL_OUT),
                       (2, 3, 1, 0)).reshape(POOL_OUT * POOL_OUT * COUT, ncls)
    b2 = params["mlp_b"].reshape(1, ncls)

    vmem = pl.BlockSpec(memory_space=pltpu.MemorySpace.VMEM)
    logp = pl.pallas_call(
        mlp_logsoftmax_kernel,
        out_shape=jax.ShapeDtypeStruct((B, ncls), jnp.float32),
        in_specs=[vmem, vmem, vmem],
        out_specs=vmem,
    )(flat, w2, b2)
    return logp


# ---------------------------------------------------------------------------
# Pure-JAX reference (mirrors the PyTorch module, NCHW layout)
# ---------------------------------------------------------------------------
def cnn_v5_reference(x_nchw, params):
    y = jax.lax.conv_general_dilated(
        x_nchw, params["conv_w"], window_strides=(1, 1),
        padding=((1, 1), (1, 1)),
        dimension_numbers=("NCHW", "OIHW", "NCHW"))
    y = y + params["conv_b"][None, :, None, None]
    inv = params["bn_gamma"] / jnp.sqrt(params["bn_var"] + BN_EPS)
    y = (y - params["bn_mean"][None, :, None, None]) * inv[None, :, None, None] \
        + params["bn_beta"][None, :, None, None]
    y = jnp.maximum(y, 0.0)
    B, C, H, W = y.shape
    Hp, Wp = H // 2, W // 2
    y = y[:, :, :2 * Hp, :2 * Wp].reshape(B, C, Hp, 2, Wp, 2).max(axis=(3, 5))
    rows = []
    for i in range(POOL_OUT):
        hs, he = (i * Hp) // POOL_OUT, ((i + 1) * Hp + POOL_OUT - 1) // POOL_OUT
        cols = []
        for j in range(POOL_OUT):
            ws, we = (j * Wp) // POOL_OUT, ((j + 1) * Wp + POOL_OUT - 1) // POOL_OUT
            cols.append(jnp.mean(y[:, :, hs:he, ws:we], axis=(2, 3)))
        rows.append(jnp.stack(cols, axis=-1))
    p = jnp.stack(rows, axis=-2)                                   # [B, C, 7, 7]
    flat = p.reshape(B, C * POOL_OUT * POOL_OUT)                   # (c, i, j) order
    logits = flat @ params["mlp_w"].T + params["mlp_b"]
    return jax.nn.log_softmax(logits, axis=-1)


def init_params(key, input_ch, class_num):
    ks = jax.random.split(key, 8)
    feat = COUT * POOL_OUT * POOL_OUT                              # 980
    return {
        "conv_w": 0.1 * jax.random.normal(ks[0], (COUT, input_ch, 3, 3), jnp.float32),
        "conv_b": 0.1 * jax.random.normal(ks[1], (COUT,), jnp.float32),
        "bn_gamma": 1.0 + 0.1 * jax.random.normal(ks[2], (COUT,), jnp.float32),
        "bn_beta": 0.1 * jax.random.normal(ks[3], (COUT,), jnp.float32),
        "bn_mean": 0.1 * jax.random.normal(ks[4], (COUT,), jnp.float32),
        "bn_var": 1.0 + 0.5 * jax.nn.sigmoid(jax.random.normal(ks[5], (COUT,), jnp.float32)),
        "mlp_w": 0.1 * jax.random.normal(ks[6], (class_num, feat), jnp.float32),
        "mlp_b": 0.1 * jax.random.normal(ks[7], (class_num,), jnp.float32),
    }


if __name__ == "__main__":
    key = jax.random.PRNGKey(0)
    kx, kp = jax.random.split(key)

    B, Cin, H, W, ncls = 2, 4, 16, 16, 10
    x = jax.random.normal(kx, (B, Cin, H, W), jnp.float32)         # PyTorch NCHW input
    params = init_params(kp, Cin, ncls)

    out = jax.jit(cnn_v5_forward)(x, params)
    jax.block_until_ready(out)
    assert out.shape == (B, ncls)

    ref = cnn_v5_reference(x, params)
    assert jnp.allclose(out, ref, atol=1e-4, rtol=1e-4), \
        float(jnp.max(jnp.abs(out - ref)))

    print("KERNEL_OK")
</pallas_src>

<mosaic_0001>
module attributes {stable_mosaic.version = 11 : i64} {
  func.func @conv_pool_kernel(%arg0: i32, %arg1: memref<1x256x128xf32, #tpu.memory_space<vmem>>, %arg2: memref<128x20xf32, #tpu.memory_space<vmem>>, %arg3: memref<1x20xf32, #tpu.memory_space<vmem>>, %arg4: memref<49x64xf32, #tpu.memory_space<vmem>>, %arg5: memref<1x49x20xf32, #tpu.memory_space<vmem>>) attributes {dimension_semantics = [#tpu.dimension_semantics<parallel>], iteration_bounds = array<i64: 2>, scalar_prefetch = 0 : i64, scratch_operands = 0 : i64, tpu.core_type = #tpu.core_type<tc>, window_params = [{transform_indices = @transform_0, window_bounds = array<i64: 1, 256, 128>}, {pipeline_mode = #tpu.pipeline_mode<synchronous>, transform_indices = @transform_1, window_bounds = array<i64: 128, 20>}, {pipeline_mode = #tpu.pipeline_mode<synchronous>, transform_indices = @transform_2, window_bounds = array<i64: 1, 20>}, {pipeline_mode = #tpu.pipeline_mode<synchronous>, transform_indices = @transform_3, window_bounds = array<i64: 49, 64>}, {transform_indices = @transform_4, window_bounds = array<i64: 1, 49, 20>}]} {
    %c0 = arith.constant 0 : index
    %c0_0 = arith.constant 0 : index
    %c0_1 = arith.constant 0 : index
    %0 = vector.load %arg1[%c0, %c0_0, %c0_1] : memref<1x256x128xf32, #tpu.memory_space<vmem>>, vector<1x256x128xf32>
    %1 = vector.shape_cast %0 : vector<1x256x128xf32> to vector<256x128xf32>
    %c0_2 = arith.constant 0 : index
    %c0_3 = arith.constant 0 : index
    %2 = vector.load %arg2[%c0_2, %c0_3] : memref<128x20xf32, #tpu.memory_space<vmem>>, vector<128x20xf32>
    %cst = arith.constant dense<0.000000e+00> : vector<256x20xf32>
    %3 = tpu.matmul %1, %2, %cst {dimension_numbers = #tpu.dot_dimension_numbers<[1], [0], [0], [1], [0, 0, 1, 1], [], []>} : vector<256x128xf32>, vector<128x20xf32>, vector<256x20xf32> -> vector<256x20xf32>
    %c0_4 = arith.constant 0 : index
    %c0_5 = arith.constant 0 : index
    %4 = vector.load %arg3[%c0_4, %c0_5] : memref<1x20xf32, #tpu.memory_space<vmem>>, vector<1x20xf32>
    %5 = vector.shape_cast %4 : vector<1x20xf32> to vector<20xf32>
    %6 = vector.shape_cast %5 : vector<20xf32> to vector<1x20xf32>
    %7 = vector.broadcast %6 : vector<1x20xf32> to vector<256x20xf32>
    %8 = arith.addf %3, %7 : vector<256x20xf32>
    %cst_6 = arith.constant 0.000000e+00 : f32
    %9 = vector.broadcast %cst_6 : f32 to vector<256x20xf32>
    %10 = arith.maximumf %8, %9 : vector<256x20xf32>
    %11 = vector.extract_strided_slice %10 {offsets = [0, 0], sizes = [64, 20], strides = [1, 1]} : vector<256x20xf32> to vector<64x20xf32>
    %12 = vector.extract_strided_slice %10 {offsets = [64, 0], sizes = [64, 20], strides = [1, 1]} : vector<256x20xf32> to vector<64x20xf32>
    %13 = arith.maximumf %11, %12 : vector<64x20xf32>
    %14 = vector.extract_strided_slice %10 {offsets = [128, 0], sizes = [64, 20], strides = [1, 1]} : vector<256x20xf32> to vector<64x20xf32>
    %15 = vector.extract_strided_slice %10 {offsets = [192, 0], sizes = [64, 20], strides = [1, 1]} : vector<256x20xf32> to vector<64x20xf32>
    %16 = arith.maximumf %14, %15 : vector<64x20xf32>
    %17 = arith.maximumf %13, %16 : vector<64x20xf32>
    %c0_7 = arith.constant 0 : index
    %c0_8 = arith.constant 0 : index
    %18 = vector.load %arg4[%c0_7, %c0_8] : memref<49x64xf32, #tpu.memory_space<vmem>>, vector<49x64xf32>
    %cst_9 = arith.constant dense<0.000000e+00> : vector<49x20xf32>
    %19 = tpu.matmul %18, %17, %cst_9 {dimension_numbers = #tpu.dot_dimension_numbers<[1], [0], [0], [1], [0, 0, 1, 1], [], []>} : vector<49x64xf32>, vector<64x20xf32>, vector<49x20xf32> -> vector<49x20xf32>
    %20 = vector.shape_cast %19 : vector<49x20xf32> to vector<1x49x20xf32>
    %c0_10 = arith.constant 0 : index
    %c0_11 = arith.constant 0 : index
    %c0_12 = arith.constant 0 : index
    %21 = vector.load %arg5[%c0_10, %c0_11, %c0_12] : memref<1x49x20xf32, #tpu.memory_space<vmem>>, vector<1x49x20xf32>
    tpu.vector_store %arg5[%c0_10, %c0_11, %c0_12], %20 {strides = array<i32>} : memref<1x49x20xf32, #tpu.memory_space<vmem>>, vector<1x49x20xf32>,
    return
  }
  func.func @transform_0(%arg0: i32) -> (i32, i32, i32) {
    %c0_i32 = arith.constant 0 : i32
    %c0_i32_0 = arith.constant 0 : i32
    %c0_i32_1 = arith.constant 0 : i32
    return %arg0, %c0_i32, %c0_i32_0 : i32, i32, i32
  }
  func.func @transform_1(%arg0: i32) -> (i32, i32) {
    %c0_i32 = arith.constant 0 : i32
    %c0_i32_0 = arith.constant 0 : i32
    %c0_i32_1 = arith.constant 0 : i32
    return %c0_i32, %c0_i32_0 : i32, i32
  }
  func.func @transform_2(%arg0: i32) -> (i32, i32) {
    %c0_i32 = arith.constant 0 : i32
    %c0_i32_0 = arith.constant 0 : i32
    %c0_i32_1 = arith.constant 0 : i32
    return %c0_i32, %c0_i32_0 : i32, i32
  }
  func.func @transform_3(%arg0: i32) -> (i32, i32) {
    %c0_i32 = arith.constant 0 : i32
    %c0_i32_0 = arith.constant 0 : i32
    %c0_i32_1 = arith.constant 0 : i32
    return %c0_i32, %c0_i32_0 : i32, i32
  }
  func.func @transform_4(%arg0: i32) -> (i32, i32, i32) {
    %c0_i32 = arith.constant 0 : i32
    %c0_i32_0 = arith.constant 0 : i32
    %c0_i32_1 = arith.constant 0 : i32
    return %arg0, %c0_i32, %c0_i32_0 : i32, i32, i32
  }
}

module attributes {stable_mosaic.version = 11 : i64} {
  func.func @mlp_logsoftmax_kernel(%arg0: memref<2x980xf32, #tpu.memory_space<vmem>>, %arg1: memref<980x10xf32, #tpu.memory_space<vmem>>, %arg2: memref<1x10xf32, #tpu.memory_space<vmem>>, %arg3: memref<2x10xf32, #tpu.memory_space<vmem>>) attributes {dimension_semantics = [], scalar_prefetch = 0 : i64, scratch_operands = 0 : i64, tpu.core_type = #tpu.core_type<tc>} {
    %c0 = arith.constant 0 : index
    %c0_0 = arith.constant 0 : index
    %0 = vector.load %arg0[%c0, %c0_0] : memref<2x980xf32, #tpu.memory_space<vmem>>, vector<2x980xf32>
    %c0_1 = arith.constant 0 : index
    %c0_2 = arith.constant 0 : index
    %1 = vector.load %arg1[%c0_1, %c0_2] : memref<980x10xf32, #tpu.memory_space<vmem>>, vector<980x10xf32>
    %cst = arith.constant dense<0.000000e+00> : vector<2x10xf32>
    %2 = tpu.matmul %0, %1, %cst {dimension_numbers = #tpu.dot_dimension_numbers<[1], [0], [0], [1], [0, 0, 1, 1], [], []>} : vector<2x980xf32>, vector<980x10xf32>, vector<2x10xf32> -> vector<2x10xf32>
    %c0_3 = arith.constant 0 : index
    %c0_4 = arith.constant 0 : index
    %3 = vector.load %arg2[%c0_3, %c0_4] : memref<1x10xf32, #tpu.memory_space<vmem>>, vector<1x10xf32>
    %4 = vector.shape_cast %3 : vector<1x10xf32> to vector<10xf32>
    %5 = vector.shape_cast %4 : vector<10xf32> to vector<1x10xf32>
    %6 = vector.broadcast %5 : vector<1x10xf32> to vector<2x10xf32>
    %7 = arith.addf %2, %6 : vector<2x10xf32>
    %cst_5 = arith.constant dense<0xFF800000> : vector<2xf32>
    %8 = vector.multi_reduction <maximumf>, %7, %cst_5 [1] : vector<2x10xf32> to vector<2xf32>
    %9 = vector.shape_cast %8 : vector<2xf32> to vector<2x1xf32>
    %10 = vector.broadcast %9 : vector<2x1xf32> to vector<2x10xf32>
    %11 = arith.subf %7, %10 : vector<2x10xf32>
    %12 = math.exp %11 : vector<2x10xf32>
    %cst_6 = arith.constant dense<0.000000e+00> : vector<2xf32>
    %13 = vector.multi_reduction <add>, %12, %cst_6 [1] : vector<2x10xf32> to vector<2xf32>
    %14 = vector.shape_cast %13 : vector<2xf32> to vector<2x1xf32>
    %15 = math.log %14 : vector<2x1xf32>
    %16 = vector.broadcast %15 : vector<2x1xf32> to vector<2x10xf32>
    %17 = arith.subf %11, %16 : vector<2x10xf32>
    %c0_7 = arith.constant 0 : index
    %c0_8 = arith.constant 0 : index
    %18 = vector.load %arg3[%c0_7, %c0_8] : memref<2x10xf32, #tpu.memory_space<vmem>>, vector<2x10xf32>
    tpu.vector_store %arg3[%c0_7, %c0_8], %17 {strides = array<i32>} : memref<2x10xf32, #tpu.memory_space<vmem>>, vector<2x10xf32>,
    return
  }
}

</mosaic_0001>

<llo_original>
// kernel: cnn_v5_forward.2
$region0: #{cnn_v5_forward.2}
  #allocation0 [shape = 'u32[]', space=smem, size = 0x4, offset = 0x4, fixed_abs, tag = 'smem constant byte address 0x4 - core index']
  #allocation1 [shape = 'u32[144,128]{1,0:T(1,128)}', space=vmem, size = 0x12000, scoped, tag = 'internal scratch']
  %s0 = inlined_call_operand.vmem [shape: f32[2,256,128], index: 0, kind: input, shape index: {}]
  %s1 = inlined_call_operand.vmem [shape: f32[128,20], index: 1, kind: input, shape index: {}]
  %s2 = inlined_call_operand.vmem [shape: f32[1,20], index: 2, kind: input, shape index: {}]
  %s3 = inlined_call_operand.vmem [shape: f32[49,64], index: 3, kind: input, shape index: {}]
  %s4 = inlined_call_operand.vmem [shape: f32[2,49,20], index: 4, kind: output, shape index: {}]
  %s5 = sld [smem:[#allocation0]]
  $region49: #{cnn_v5_forward.2} parent=0
    _
  %s7 = ssub.s32 1, %s5
  %s8 = scalar_select 0, %s7, %s5
  loop: start=0, step=1, limit=4
  $region2: #{cnn_v5_forward.2} parent=0 // loop_pre_header
    _
  $region3: #{cnn_v5_forward.2} parent=0 // loop_header
    %s10 = sphi 0, %s14
    %p11 = scmp.ge.s32.totalorder %s10, 4
    %s20 = sphi 0, %s22
    %s23 = sphi 0, %s20
    %s24 = sphi 0, %s23
    %s40 = sphi 0, %s24
    %s44 = sphi 0, %s44
    %s46 = sphi 0, %s44
    %s47 = sphi 0, %s46
    %s61 = sphi 0, %s47
    %s65 = sphi 0, %s65
    %s67 = sphi 0, %s65
    %s68 = sphi 0, %s67
    %s82 = sphi 0, %s68
    %s86 = sphi 0, %s86
    %s88 = sphi 0, %s86
    %s89 = sphi 0, %s88
    %s103 = sphi 0, %s89
    %s109 = sphi 0, %s111
    %s112 = sphi 0, %s109
    %s113 = sphi 0, %s112
    %s129 = sphi 0, %s113
  $region4: #{cnn_v5_forward.2} parent=0 // loop_header_branch
    %13 = sbr.rel (%p11) target = $region8
  $region5: #{cnn_v5_forward.2} parent=0 // loop_body
    %s15 = ssub.s32 %s10, 1
    %s16 = ssub.s32 %s10, 2
    %s17 = sadd.s32 %s10, 1
    %s18 = ssub.s32 %s10, %s17
    %p19 = scmp.eq.s32.totalorder %s18, 0
    %s21 = sadd.s32 %s20, 1
    %s22 = scalar_select %p19, %s20, %s21
    %p25 = pneg %p19
    %p26 = scmp.eq.s32.totalorder %s10, 1
    %p27 = por %p25, %p26
    %p28 = scmp.ne.s32.totalorder %s20, %s23
    %p29 = scmp.eq.s32.totalorder %s10, 0
    %p30 = por %p28, %p29
    %p31 = scmp.ne.s32.totalorder %s20, %s23
    %p32 = scmp.eq.s32.totalorder %s15, 1
    %p33 = por %p31, %p32
    %p34 = scmp.ne.s32.totalorder %s23, %s24
    %p35 = scmp.eq.s32.totalorder %s15, 0
    %p36 = por %p34, %p35
    %p37 = scmp.ne.s32.totalorder %s23, %s24
    %p38 = scmp.eq.s32.totalorder %s16, 1
    %p39 = por %p37, %p38
    %p41 = scmp.ne.s32.totalorder %s24, %s40
    %p42 = scmp.eq.s32.totalorder %s16, 0
    %p43 = por %p41, %p42
    %s45 = sadd.s32 %s44, 1
    %p48 = scmp.eq.s32.totalorder %s10, 1
    %p49 = scmp.ne.s32.totalorder %s44, %s46
    %p50 = scmp.eq.s32.totalorder %s10, 0
    %p51 = por %p49, %p50
    %p52 = scmp.ne.s32.totalorder %s44, %s46
    %p53 = scmp.eq.s32.totalorder %s15, 1
    %p54 = por %p52, %p53
    %p55 = scmp.ne.s32.totalorder %s46, %s47
    %p56 = scmp.eq.s32.totalorder %s15, 0
    %p57 = por %p55, %p56
    %p58 = scmp.ne.s32.totalorder %s46, %s47
    %p59 = scmp.eq.s32.totalorder %s16, 1
    %p60 = por %p58, %p59
    %p62 = scmp.ne.s32.totalorder %s47, %s61
    %p63 = scmp.eq.s32.totalorder %s16, 0
    %p64 = por %p62, %p63
    %s66 = sadd.s32 %s65, 1
    %p69 = scmp.eq.s32.totalorder %s10, 1
    %p70 = scmp.ne.s32.totalorder %s65, %s67
    %p71 = scmp.eq.s32.totalorder %s10, 0
    %p72 = por %p70, %p71
    %p73 = scmp.ne.s32.totalorder %s65, %s67
    %p74 = scmp.eq.s32.totalorder %s15, 1
    %p75 = por %p73, %p74
    %p76 = scmp.ne.s32.totalorder %s67, %s68
    %p77 = scmp.eq.s32.totalorder %s15, 0
    %p78 = por %p76, %p77
    %p79 = scmp.ne.s32.totalorder %s67, %s68
    %p80 = scmp.eq.s32.totalorder %s16, 1
    %p81 = por %p79, %p80
    %p83 = scmp.ne.s32.totalorder %s68, %s82
    %p84 = scmp.eq.s32.totalorder %s16, 0
    %p85 = por %p83, %p84
    %s87 = sadd.s32 %s86, 1
    %p90 = scmp.eq.s32.totalorder %s10, 1
    %p91 = scmp.ne.s32.totalorder %s86, %s88
    %p92 = scmp.eq.s32.totalorder %s10, 0
    %p93 = por %p91, %p92
    %p94 = scmp.ne.s32.totalorder %s86, %s88
    %p95 = scmp.eq.s32.totalorder %s15, 1
    %p96 = por %p94, %p95
    %p97 = scmp.ne.s32.totalorder %s88, %s89
    %p98 = scmp.eq.s32.totalorder %s15, 0
    %p99 = por %p97, %p98
    %p100 = scmp.ne.s32.totalorder %s88, %s89
    %p101 = scmp.eq.s32.totalorder %s16, 1
    %p102 = por %p100, %p101
    %p104 = scmp.ne.s32.totalorder %s89, %s103
    %p105 = scmp.eq.s32.totalorder %s16, 0
    %p106 = por %p104, %p105
    %s107 = ssub.s32 %s10, %s17
    %p108 = scmp.eq.s32.totalorder %s107, 0
    %s110 = sadd.s32 %s109, 1
    %s111 = scalar_select %p108, %s109, %s110
    %p114 = pneg %p108
    %p115 = scmp.eq.s32.totalorder %s10, 1
    %p116 = por %p114, %p115
    %p117 = scmp.ne.s32.totalorder %s109, %s112
    %p118 = scmp.eq.s32.totalorder %s10, 0
    %p119 = por %p117, %p118
    %p120 = scmp.ne.s32.totalorder %s109, %s112
    %p121 = scmp.eq.s32.totalorder %s15, 1
    %p122 = por %p120, %p121
    %p123 = scmp.ne.s32.totalorder %s112, %s113
    %p124 = scmp.eq.s32.totalorder %s15, 0
    %p125 = por %p123, %p124
    %p126 = scmp.ne.s32.totalorder %s112, %s113
    %p127 = scmp.eq.s32.totalorder %s16, 1
    %p128 = por %p126, %p127
    %p130 = scmp.ne.s32.totalorder %s113, %s129
    %p131 = scmp.eq.s32.totalorder %s16, 0
    %p132 = por %p130, %p131
    %p133 = scmp.le.s32.totalorder 1, %s10
    %p134 = scmp.lt.s32.totalorder %s10, 3
    %p135 = pnand %p133, %p134
    %p136 = pneg %p135
    // Predicated region
    $region9: #{cnn_v5_forward.2} parent=5 // pred_check
      _
    $region10: #{cnn_v5_forward.2} parent=5 // pred_check_branch
      %138 = sbr.rel (%p135) target = $region12
    $region11: #{cnn_v5_forward.2} parent=5 // pred_region
      %s139 = ssub.s32 %s10, 1
      // Predicated region
      $region13: #{cnn_v5_forward.2} parent=11 // pred_check
        %p140 = pneg %p57
      $region14: #{cnn_v5_forward.2} parent=11 // pred_check_branch
        %142 = sbr.rel (%p140) target = $region16
      $region15: #{cnn_v5_forward.2} parent=11 // pred_region
        _
      $region16: #{cnn_v5_forward.2} parent=11 // pred_fallthru
        _
      // Predicated region
      $region17: #{cnn_v5_forward.2} parent=11 // pred_check
        %p143 = pneg %p78
      $region18: #{cnn_v5_forward.2} parent=11 // pred_check_branch
        %145 = sbr.rel (%p143) target = $region20
      $region19: #{cnn_v5_forward.2} parent=11 // pred_region
        _
      $region20: #{cnn_v5_forward.2} parent=11 // pred_fallthru
        _
      // Predicated region
      $region21: #{cnn_v5_forward.2} parent=11 // pred_check
        %p146 = pneg %p99
      $region22: #{cnn_v5_forward.2} parent=11 // pred_check_branch
        %148 = sbr.rel (%p146) target = $region24
      $region23: #{cnn_v5_forward.2} parent=11 // pred_region
        _
      $region24: #{cnn_v5_forward.2} parent=11 // pred_fallthru
        _
    $region12: #{cnn_v5_forward.2} parent=5 // pred_fallthru
      _
    %p149 = scmp.lt.s32.totalorder %s10, 2
    // Predicated region
    $region25: #{cnn_v5_forward.2} parent=5 // pred_check
      %p150 = pneg %p149
    $region26: #{cnn_v5_forward.2} parent=5 // pred_check_branch
      %152 = sbr.rel (%p150) target = $region28
    $region27: #{cnn_v5_forward.2} parent=5 // pred_region
      // Predicated region
      $region29: #{cnn_v5_forward.2} parent=27 // pred_check
        %p153 = pneg %p30
      $region30: #{cnn_v5_forward.2} parent=27 // pred_check_branch
        %155 = sbr.rel (%p153) target = $region32
      $region31: #{cnn_v5_forward.2} parent=27 // pred_region
        %p156 = scmp.lt.s32.totalorder %s10, 1
        %s157 = scalar_select %p156, %s10, 1
        %s158 = smul.addr %s157, 32
        %s159 = smul.addr %s158, 8
        %s160 = scalar_lea.vmem %s0, %s159
      $region32: #{cnn_v5_forward.2} parent=27 // pred_fallthru
        _
    $region28: #{cnn_v5_forward.2} parent=5 // pred_fallthru
      _
    %p161 = scmp.le.s32.totalorder 1, %s10
    %p162 = scmp.lt.s32.totalorder %s10, 3
    %p163 = pnand %p161, %p162
    %p164 = pneg %p163
    // Predicated region
    $region33: #{cnn_v5_forward.2} parent=5 // pred_check
      _
    $region34: #{cnn_v5_forward.2} parent=5 // pred_check_branch
      %166 = sbr.rel (%p163) target = $region36
    $region35: #{cnn_v5_forward.2} parent=5 // pred_region
      %s167 = ssub.s32 %s10, 1
      %p168 = scmp.lt.s32.totalorder %s15, 1
      %s169 = scalar_select %p168, %s15, 1
      %s170 = smul.addr %s169, 32
      %s171 = smul.addr %s170, 8
      %s172 = scalar_lea.vmem %s0, %s171
      %p173 = pneg %p36
      %p174 = pneg %p33
      %p175 = pneg %p57
      %p176 = pneg %p54
      %p177 = pneg %p78
      %p178 = pneg %p75
      %p179 = pneg %p99
      %p180 = pneg %p96
      %p181 = pneg %p125
      %p182 = pneg %p122
      %p183 = scmp.lt.s32.totalorder %s15, 1
      %s184 = scalar_select %p183, %s15, 1
      %s185 = smul.addr %s184, 7
      %s186 = smul.addr %s185, 8
      %s187 = scalar_lea.vmem %s4, %s186
      %p188 = scmp.lt.s32.totalorder %s15, 1
      %s189 = scalar_select %p188, %s15, 1
      %s190 = smul.addr %s189, 32
      %s191 = smul.addr %s190, 8
      %s192 = scalar_lea.vmem %s0, %s191
      %p193 = scmp.lt.s32.totalorder %s15, 1
      %s194 = scalar_select %p193, %s15, 1
      %s195 = smul.addr %s194, 7
      %s196 = smul.addr %s195, 8
      %s197 = scalar_lea.vmem %s4, %s196
      %v198 = vld [vmem:[%s192] sm:$0xff]
      %v199 = vld [vmem:[%s192 + $0x8] sm:$0xff]
      %v200 = vld [vmem:[%s192 + $0x10] sm:$0xff]
      %v201 = vld [vmem:[%s192 + $0x18] sm:$0xff]
      %v202 = vld [vmem:[%s192 + $0x20] sm:$0xff]
      %v203 = vld [vmem:[%s192 + $0x28] sm:$0xff]
      %v204 = vld [vmem:[%s192 + $0x30] sm:$0xff]
      %v205 = vld [vmem:[%s192 + $0x38] sm:$0xff]
      %v206 = vld [vmem:[%s192 + $0x40] sm:$0xff]
      %v207 = vld [vmem:[%s192 + $0x48] sm:$0xff]
      %v208 = vld [vmem:[%s192 + $0x50] sm:$0xff]
      %v209 = vld [vmem:[%s192 + $0x58] sm:$0xff]
      %v210 = vld [vmem:[%s192 + $0x60] sm:$0xff]
      %v211 = vld [vmem:[%s192 + $0x68] sm:$0xff]
      %v212 = vld [vmem:[%s192 + $0x70] sm:$0xff]
      %v213 = vld [vmem:[%s192 + $0x78] sm:$0xff]
      %v214 = vld [vmem:[%s192 + $0x80] sm:$0xff]
      %v215 = vld [vmem:[%s192 + $0x88] sm:$0xff]
      %v216 = vld [vmem:[%s192 + $0x90] sm:$0xff]
      %v217 = vld [vmem:[%s192 + $0x98] sm:$0xff]
      %v218 = vld [vmem:[%s192 + $0xa0] sm:$0xff]
      %v219 = vld [vmem:[%s192 + $0xa8] sm:$0xff]
      %v220 = vld [vmem:[%s192 + $0xb0] sm:$0xff]
      %v221 = vld [vmem:[%s192 + $0xb8] sm:$0xff]
      %v222 = vld [vmem:[%s192 + $0xc0] sm:$0xff]
      %v223 = vld [vmem:[%s192 + $0xc8] sm:$0xff]
      %v224 = vld [vmem:[%s192 + $0xd0] sm:$0xff]
      %v225 = vld [vmem:[%s192 + $0xd8] sm:$0xff]
      %v226 = vld [vmem:[%s192 + $0xe0] sm:$0xff]
      %v227 = vld [vmem:[%s192 + $0xe8] sm:$0xff]
      %v228 = vld [vmem:[%s192 + $0xf0] sm:$0xff]
      %v229 = vld [vmem:[%s192 + $0xf8] sm:$0xff]
      %v230 = vld [vmem:[%s1] sm:$0xff]
      %v231 = vld [vmem:[%s1 + $0x8] sm:$0xff]
      %v232 = vld [vmem:[%s1 + $0x10] sm:$0xff]
      %v233 = vld [vmem:[%s1 + $0x18] sm:$0xff]
      %v234 = vld [vmem:[%s1 + $0x20] sm:$0xff]
      %v235 = vld [vmem:[%s1 + $0x28] sm:$0xff]
      %v236 = vld [vmem:[%s1 + $0x30] sm:$0xff]
      %v237 = vld [vmem:[%s1 + $0x38] sm:$0xff]
      %v238 = vld [vmem:[%s1 + $0x40] sm:$0xff]
      %v239 = vld [vmem:[%s1 + $0x48] sm:$0xff]
      %v240 = vld [vmem:[%s1 + $0x50] sm:$0xff]
      %v241 = vld [vmem:[%s1 + $0x58] sm:$0xff]
      %v242 = vld [vmem:[%s1 + $0x60] sm:$0xff]
      %v243 = vld [vmem:[%s1 + $0x68] sm:$0xff]
      %v244 = vld [vmem:[%s1 + $0x70] sm:$0xff]
      %v245 = vld [vmem:[%s1 + $0x78] sm:$0xff]
      %v246 = vld [vmem:[%s2] sm:$0x1]
      %v248 = vlaneseq
      %v249 = vshrl.u32 %v248, 7
      %v250 = vsub.s32 0, %v249
      %v251 = vrot.slane %v246, %v250
      %253 = vmatprep.subr.mxu0 0.0
      %254 = vmatpush1.msra.mxu0 %v245
      %255 = vmatprep.subr.mxu0 0.0
      %256 = vmatpush1.msra.mxu0 %v244
      %257 = vmatprep.subr.mxu0 0.0
      %258 = vmatpush1.msra.mxu0 %v243
      %259 = vmatprep.subr.mxu0 0.0
      %260 = vmatpush1.msra.mxu0 %v242
      %261 = vmatprep.subr.mxu0 0.0
      %262 = vmatpush1.msra.mxu0 %v241
      %263 = vmatprep.subr.mxu0 0.0
      %264 = vmatpush1.msra.mxu0 %v240
      %265 = vmatprep.subr.mxu0 0.0
      %266 = vmatpush1.msra.mxu0 %v239
      %267 = vmatprep.subr.mxu0 0.0
      %268 = vmatpush1.msra.mxu0 %v238
      %269 = vmatprep.subr.mxu0 0.0
      %270 = vmatpush1.msra.mxu0 %v237
      %271 = vmatprep.subr.mxu0 0.0
      %272 = vmatpush1.msra.mxu0 %v236
      %273 = vmatprep.subr.mxu0 0.0
      %274 = vmatpush1.msra.mxu0 %v235
      %275 = vmatprep.subr.mxu0 0.0
      %276 = vmatpush1.msra.mxu0 %v234
      %277 = vmatprep.subr.mxu0 0.0
      %278 = vmatpush1.msra.mxu0 %v233
      %279 = vmatprep.subr.mxu0 0.0
      %280 = vmatpush1.msra.mxu0 %v232
      %281 = vmatprep.subr.mxu0 0.0
      %282 = vmatpush1.msra.mxu0 %v231
      %283 = vmatprep.subr.mxu0 0.0
      %284 = vmatpush1.msra.mxu0 %v230
      %285 = vmatprep.subr.mxu0 0.0
      %286 = vmatpush2.msra.mxu0 0.0
      %287 = vmatprep.subr.mxu0 0.0
      %288 = vmatpush2.msra.mxu0 0.0
      %289 = vmatprep.subr.mxu0 0.0
      %290 = vmatpush2.msra.mxu0 0.0
      %291 = vmatprep.subr.mxu0 0.0
      %292 = vmatpush2.msra.mxu0 0.0
      %293 = vmatprep.subr.mxu0 0.0
      %294 = vmatpush2.msra.mxu0 0.0
      %295 = vmatprep.subr.mxu0 0.0
      %296 = vmatpush2.msra.mxu0 0.0
      %297 = vmatprep.subr.mxu0 0.0
      %298 = vmatpush2.msra.mxu0 0.0
      %299 = vmatprep.subr.mxu0 0.0
      %300 = vmatpush2.msra.mxu0 0.0
      %301 = vmatprep.subr.mxu0 0.0
      %302 = vmatpush2.msra.mxu0 0.0
      %303 = vmatprep.subr.mxu0 0.0
      %304 = vmatpush2.msra.mxu0 0.0
      %305 = vmatprep.subr.mxu0 0.0
      %306 = vmatpush2.msra.mxu0 0.0
      %307 = vmatprep.subr.mxu0 0.0
      %308 = vmatpush2.msra.mxu0 0.0
      %309 = vmatprep.subr.mxu0 0.0
      %310 = vmatpush2.msra.mxu0 0.0
      %311 = vmatprep.subr.mxu0 0.0
      %312 = vmatpush2.msra.mxu0 0.0
      %313 = vmatprep.subr.mxu0 0.0
      %314 = vmatpush2.msra.mxu0 0.0
      %315 = vmatprep.subr.mxu0 0.0
      %316 = vmatpush2.msra.mxu0 0.0
      %317 = vmatprep.mubr.f32.mxu0 0.0
      %318 = vmatmul.mubr.f32.gmra.mxu0 %v198
      %v319 = vpop.f32.mrf.mxu0
      %v320 = vadd.f32 %v251, %v319
      %v321 = vpop.f32.mrf.mxu0
      %322 = vmatprep.mubr.f32.mxu0 0.0
      %323 = vmatmul.mubr.f32.gmra.mxu0 %v199
      %v324 = vpop.f32.mrf.mxu0
      %v325 = vadd.f32 %v251, %v324
      %v326 = vpop.f32.mrf.mxu0
      %327 = vmatprep.mubr.f32.mxu0 0.0
      %328 = vmatmul.mubr.f32.gmra.mxu0 %v200
      %v329 = vpop.f32.mrf.mxu0
      %v330 = vadd.f32 %v251, %v329
      %v331 = vpop.f32.mrf.mxu0
      %332 = vmatprep.mubr.f32.mxu0 0.0
      %333 = vmatmul.mubr.f32.gmra.mxu0 %v201
      %v334 = vpop.f32.mrf.mxu0
      %v335 = vadd.f32 %v251, %v334
      %v336 = vpop.f32.mrf.mxu0
      %337 = vmatprep.mubr.f32.mxu0 0.0
      %338 = vmatmul.mubr.f32.gmra.mxu0 %v202
      %v339 = vpop.f32.mrf.mxu0
      %v340 = vadd.f32 %v251, %v339
      %v341 = vpop.f32.mrf.mxu0
      %342 = vmatprep.mubr.f32.mxu0 0.0
      %343 = vmatmul.mubr.f32.gmra.mxu0 %v203
      %v344 = vpop.f32.mrf.mxu0
      %v345 = vadd.f32 %v251, %v344
      %v346 = vpop.f32.mrf.mxu0
      %347 = vmatprep.mubr.f32.mxu0 0.0
      %348 = vmatmul.mubr.f32.gmra.mxu0 %v204
      %v349 = vpop.f32.mrf.mxu0
      %v350 = vadd.f32 %v251, %v349
      %v351 = vpop.f32.mrf.mxu0
      %352 = vmatprep.mubr.f32.mxu0 0.0
      %353 = vmatmul.mubr.f32.gmra.mxu0 %v205
      %v354 = vpop.f32.mrf.mxu0
      %v355 = vadd.f32 %v251, %v354
      %v356 = vpop.f32.mrf.mxu0
      %357 = vmatprep.mubr.f32.mxu0 0.0
      %358 = vmatmul.mubr.f32.gmra.mxu0 %v206
      %v359 = vpop.f32.mrf.mxu0
      %v360 = vadd.f32 %v251, %v359
      %v361 = vpop.f32.mrf.mxu0
      %362 = vmatprep.mubr.f32.mxu0 0.0
      %363 = vmatmul.mubr.f32.gmra.mxu0 %v207
      %v364 = vpop.f32.mrf.mxu0
      %v365 = vadd.f32 %v251, %v364
      %v366 = vpop.f32.mrf.mxu0
      %367 = vmatprep.mubr.f32.mxu0 0.0
      %368 = vmatmul.mubr.f32.gmra.mxu0 %v208
      %v369 = vpop.f32.mrf.mxu0
      %v370 = vadd.f32 %v251, %v369
      %v371 = vpop.f32.mrf.mxu0
      %372 = vmatprep.mubr.f32.mxu0 0.0
      %373 = vmatmul.mubr.f32.gmra.mxu0 %v209
      %v374 = vpop.f32.mrf.mxu0
      %v375 = vadd.f32 %v251, %v374
      %v376 = vpop.f32.mrf.mxu0
      %377 = vmatprep.mubr.f32.mxu0 0.0
      %378 = vmatmul.mubr.f32.gmra.mxu0 %v210
      %v379 = vpop.f32.mrf.mxu0
      %v380 = vadd.f32 %v251, %v379
      %v381 = vpop.f32.mrf.mxu0
      %382 = vmatprep.mubr.f32.mxu0 0.0
      %383 = vmatmul.mubr.f32.gmra.mxu0 %v211
      %v384 = vpop.f32.mrf.mxu0
      %v385 = vadd.f32 %v251, %v384
      %v386 = vpop.f32.mrf.mxu0
      %387 = vmatprep.mubr.f32.mxu0 0.0
      %388 = vmatmul.mubr.f32.gmra.mxu0 %v212
      %v389 = vpop.f32.mrf.mxu0
      %v390 = vadd.f32 %v251, %v389
      %v391 = vpop.f32.mrf.mxu0
      %392 = vmatprep.mubr.f32.mxu0 0.0
      %393 = vmatmul.mubr.f32.gmra.mxu0 %v213
      %v394 = vpop.f32.mrf.mxu0
      %v395 = vadd.f32 %v251, %v394
      %v396 = vpop.f32.mrf.mxu0
      %397 = vmatprep.mubr.f32.mxu0 0.0
      %398 = vmatmul.mubr.f32.gmra.mxu0 %v214
      %v399 = vpop.f32.mrf.mxu0
      %v400 = vadd.f32 %v251, %v399
      %v401 = vpop.f32.mrf.mxu0
      %402 = vmatprep.mubr.f32.mxu0 0.0
      %403 = vmatmul.mubr.f32.gmra.mxu0 %v215
      %v404 = vpop.f32.mrf.mxu0
      %v405 = vadd.f32 %v251, %v404
      %v406 = vpop.f32.mrf.mxu0
      %407 = vmatprep.mubr.f32.mxu0 0.0
      %408 = vmatmul.mubr.f32.gmra.mxu0 %v216
      %v409 = vpop.f32.mrf.mxu0
      %v410 = vadd.f32 %v251, %v409
      %v411 = vpop.f32.mrf.mxu0
      %412 = vmatprep.mubr.f32.mxu0 0.0
      %413 = vmatmul.mubr.f32.gmra.mxu0 %v217
      %v414 = vpop.f32.mrf.mxu0
      %v415 = vadd.f32 %v251, %v414
      %v416 = vpop.f32.mrf.mxu0
      %417 = vmatprep.mubr.f32.mxu0 0.0
      %418 = vmatmul.mubr.f32.gmra.mxu0 %v218
      %v419 = vpop.f32.mrf.mxu0
      %v420 = vadd.f32 %v251, %v419
      %v421 = vpop.f32.mrf.mxu0
      %422 = vmatprep.mubr.f32.mxu0 0.0
      %423 = vmatmul.mubr.f32.gmra.mxu0 %v219
      %v424 = vpop.f32.mrf.mxu0
      %v425 = vadd.f32 %v251, %v424
      %v426 = vpop.f32.mrf.mxu0
      %427 = vmatprep.mubr.f32.mxu0 0.0
      %428 = vmatmul.mubr.f32.gmra.mxu0 %v220
      %v429 = vpop.f32.mrf.mxu0
      %v430 = vadd.f32 %v251, %v429
      %v431 = vpop.f32.mrf.mxu0
      %432 = vmatprep.mubr.f32.mxu0 0.0
      %433 = vmatmul.mubr.f32.gmra.mxu0 %v221
      %v434 = vpop.f32.mrf.mxu0
      %v435 = vadd.f32 %v251, %v434
      %v436 = vpop.f32.mrf.mxu0
      %437 = vmatprep.mubr.f32.mxu0 0.0
      %438 = vmatmul.mubr.f32.gmra.mxu0 %v222
      %v439 = vpop.f32.mrf.mxu0
      %v440 = vadd.f32 %v251, %v439
      %v441 = vpop.f32.mrf.mxu0
      %442 = vmatprep.mubr.f32.mxu0 0.0
      %443 = vmatmul.mubr.f32.gmra.mxu0 %v223
      %v444 = vpop.f32.mrf.mxu0
      %v445 = vadd.f32 %v251, %v444
      %v446 = vpop.f32.mrf.mxu0
      %447 = vmatprep.mubr.f32.mxu0 0.0
      %448 = vmatmul.mubr.f32.gmra.mxu0 %v224
      %v449 = vpop.f32.mrf.mxu0
      %v450 = vadd.f32 %v251, %v449
      %v451 = vpop.f32.mrf.mxu0
      %452 = vmatprep.mubr.f32.mxu0 0.0
      %453 = vmatmul.mubr.f32.gmra.mxu0 %v225
      %v454 = vpop.f32.mrf.mxu0
      %v455 = vadd.f32 %v251, %v454
      %v456 = vpop.f32.mrf.mxu0
      %457 = vmatprep.mubr.f32.mxu0 0.0
      %458 = vmatmul.mubr.f32.gmra.mxu0 %v226
      %v459 = vpop.f32.mrf.mxu0
      %v460 = vadd.f32 %v251, %v459
      %v461 = vpop.f32.mrf.mxu0
      %462 = vmatprep.mubr.f32.mxu0 0.0
      %463 = vmatmul.mubr.f32.gmra.mxu0 %v227
      %v464 = vpop.f32.mrf.mxu0
      %v465 = vadd.f32 %v251, %v464
      %v466 = vpop.f32.mrf.mxu0
      %467 = vmatprep.mubr.f32.mxu0 0.0
      %468 = vmatmul.mubr.f32.gmra.mxu0 %v228
      %v469 = vpop.f32.mrf.mxu0
      %v470 = vadd.f32 %v251, %v469
      %v471 = vpop.f32.mrf.mxu0
      %472 = vmatprep.mubr.f32.mxu0 0.0
      %473 = vmatmul.mubr.f32.gmra.mxu0 %v229
      %v474 = vpop.f32.mrf.mxu0
      %v475 = vadd.f32 %v251, %v474
      %v476 = vpop.f32.mrf.mxu0
      %477 = vdwg.mxu0
      %v478 = vmax.f32 %v320, 0.0
      %v479 = vmax.f32 %v325, 0.0
      %v480 = vmax.f32 %v330, 0.0
      %v481 = vmax.f32 %v335, 0.0
      %v482 = vmax.f32 %v340, 0.0
      %v483 = vmax.f32 %v345, 0.0
      %v484 = vmax.f32 %v350, 0.0
      %v485 = vmax.f32 %v355, 0.0
      %v486 = vmax.f32 %v360, 0.0
      %v487 = vmax.f32 %v365, 0.0
      %v488 = vmax.f32 %v370, 0.0
      %v489 = vmax.f32 %v375, 0.0
      %v490 = vmax.f32 %v380, 0.0
      %v491 = vmax.f32 %v385, 0.0
      %v492 = vmax.f32 %v390, 0.0
      %v493 = vmax.f32 %v395, 0.0
      %v494 = vmax.f32 %v400, 0.0
      %v495 = vmax.f32 %v405, 0.0
      %v496 = vmax.f32 %v410, 0.0
      %v497 = vmax.f32 %v415, 0.0
      %v498 = vmax.f32 %v420, 0.0
      %v499 = vmax.f32 %v425, 0.0
      %v500 = vmax.f32 %v430, 0.0
      %v501 = vmax.f32 %v435, 0.0
      %v502 = vmax.f32 %v440, 0.0
      %v503 = vmax.f32 %v445, 0.0
      %v504 = vmax.f32 %v450, 0.0
      %v505 = vmax.f32 %v455, 0.0
      %v506 = vmax.f32 %v460, 0.0
      %v507 = vmax.f32 %v465, 0.0
      %v508 = vmax.f32 %v470, 0.0
      %v509 = vmax.f32 %v475, 0.0
      %v510 = vmax.f32 %v478, %v486
      %v511 = vmax.f32 %v479, %v487
      %v512 = vmax.f32 %v480, %v488
      %v513 = vmax.f32 %v481, %v489
      %v514 = vmax.f32 %v482, %v490
      %v515 = vmax.f32 %v483, %v491
      %v516 = vmax.f32 %v484, %v492
      %v517 = vmax.f32 %v485, %v493
      %v518 = vmax.f32 %v494, %v502
      %v519 = vmax.f32 %v495, %v503
      %v520 = vmax.f32 %v496, %v504
      %v521 = vmax.f32 %v497, %v505
      %v522 = vmax.f32 %v498, %v506
      %v523 = vmax.f32 %v499, %v507
      %v524 = vmax.f32 %v500, %v508
      %v525 = vmax.f32 %v501, %v509
      %v526 = vmax.f32 %v510, %v518
      %v527 = vmax.f32 %v511, %v519
      %v528 = vmax.f32 %v512, %v520
      %v529 = vmax.f32 %v513, %v521
      %v530 = vmax.f32 %v514, %v522
      %v531 = vmax.f32 %v515, %v523
      %v532 = vmax.f32 %v516, %v524
      %v533 = vmax.f32 %v517, %v525
      %v534 = vld [vmem:[%s3] sm:$0xff]
      %v535 = vld [vmem:[%s3 + $0x8] sm:$0xff]
      %v536 = vld [vmem:[%s3 + $0x10] sm:$0xff]
      %v537 = vld [vmem:[%s3 + $0x18] sm:$0xff]
      %v538 = vld [vmem:[%s3 + $0x20] sm:$0xff]
      %v539 = vld [vmem:[%s3 + $0x28] sm:$0xff]
      %v540 = vld [vmem:[%s3 + $0x30] sm:$0x1]
      %vm541 = vcmask 523264
      %v543 = vsel %vm541, %v534, 0
      %v546 = vsel %vm541, %v535, 0
      %v549 = vsel %vm541, %v536, 0
      %v552 = vsel %vm541, %v537, 0
      %v555 = vsel %vm541, %v538, 0
      %v558 = vsel %vm541, %v539, 0
      %v561 = vsel %vm541, %v540, 0
      %563 = vmatprep.subr.mxu0 0.0
      %564 = vmatpush1.msra.mxu0 0.0
      %565 = vmatprep.subr.mxu0 0.0
      %566 = vmatpush1.msra.mxu0 0.0
      %567 = vmatprep.subr.mxu0 0.0
      %568 = vmatpush1.msra.mxu0 0.0
      %569 = vmatprep.subr.mxu0 0.0
      %570 = vmatpush1.msra.mxu0 0.0
      %571 = vmatprep.subr.mxu0 0.0
      %572 = vmatpush1.msra.mxu0 0.0
      %573 = vmatprep.subr.mxu0 0.0
      %574 = vmatpush1.msra.mxu0 0.0
      %575 = vmatprep.subr.mxu0 0.0
      %576 = vmatpush1.msra.mxu0 0.0
      %577 = vmatprep.subr.mxu0 0.0
      %578 = vmatpush1.msra.mxu0 0.0
      %579 = vmatprep.subr.mxu0 0.0
      %580 = vmatpush1.msra.mxu0 %v533
      %581 = vmatprep.subr.mxu0 0.0
      %582 = vmatpush1.msra.mxu0 %v532
      %583 = vmatprep.subr.mxu0 0.0
      %584 = vmatpush1.msra.mxu0 %v531
      %585 = vmatprep.subr.mxu0 0.0
      %586 = vmatpush1.msra.mxu0 %v530
      %587 = vmatprep.subr.mxu0 0.0
      %588 = vmatpush1.msra.mxu0 %v529
      %589 = vmatprep.subr.mxu0 0.0
      %590 = vmatpush1.msra.mxu0 %v528
      %591 = vmatprep.subr.mxu0 0.0
      %592 = vmatpush1.msra.mxu0 %v527
      %593 = vmatprep.subr.mxu0 0.0
      %594 = vmatpush1.msra.mxu0 %v526
      %595 = vmatprep.subr.mxu0 0.0
      %596 = vmatpush2.msra.mxu0 0.0
      %597 = vmatprep.subr.mxu0 0.0
      %598 = vmatpush2.msra.mxu0 0.0
      %599 = vmatprep.subr.mxu0 0.0
      %600 = vmatpush2.msra.mxu0 0.0
      %601 = vmatprep.subr.mxu0 0.0
      %602 = vmatpush2.msra.mxu0 0.0
      %603 = vmatprep.subr.mxu0 0.0
      %604 = vmatpush2.msra.mxu0 0.0
      %605 = vmatprep.subr.mxu0 0.0
      %606 = vmatpush2.msra.mxu0 0.0
      %607 = vmatprep.subr.mxu0 0.0
      %608 = vmatpush2.msra.mxu0 0.0
      %609 = vmatprep.subr.mxu0 0.0
      %610 = vmatpush2.msra.mxu0 0.0
      %611 = vmatprep.subr.mxu0 0.0
      %612 = vmatpush2.msra.mxu0 0.0
      %613 = vmatprep.subr.mxu0 0.0
      %614 = vmatpush2.msra.mxu0 0.0
      %615 = vmatprep.subr.mxu0 0.0
      %616 = vmatpush2.msra.mxu0 0.0
      %617 = vmatprep.subr.mxu0 0.0
      %618 = vmatpush2.msra.mxu0 0.0
      %619 = vmatprep.subr.mxu0 0.0
      %620 = vmatpush2.msra.mxu0 0.0
      %621 = vmatprep.subr.mxu0 0.0
      %622 = vmatpush2.msra.mxu0 0.0
      %623 = vmatprep.subr.mxu0 0.0
      %624 = vmatpush2.msra.mxu0 0.0
      %625 = vmatprep.subr.mxu0 0.0
      %626 = vmatpush2.msra.mxu0 0.0
      %627 = vmatprep.mubr.f32.mxu0 0.0
      %628 = vmatmul.mubr.f32.gmra.mxu0 %v543
      %v629 = vpop.f32.mrf.mxu0
      %v630 = vadd.f32 0.0, %v629
      %v631 = vpop.f32.mrf.mxu0
      %632 = vmatprep.mubr.f32.mxu0 0.0
      %633 = vmatmul.mubr.f32.gmra.mxu0 %v546
      %v634 = vpop.f32.mrf.mxu0
      %v635 = vadd.f32 0.0, %v634
      %v636 = vpop.f32.mrf.mxu0
      %637 = vmatprep.mubr.f32.mxu0 0.0
      %638 = vmatmul.mubr.f32.gmra.mxu0 %v549
      %v639 = vpop.f32.mrf.mxu0
      %v640 = vadd.f32 0.0, %v639
      %v641 = vpop.f32.mrf.mxu0
      %642 = vmatprep.mubr.f32.mxu0 0.0
      %643 = vmatmul.mubr.f32.gmra.mxu0 %v552
      %v644 = vpop.f32.mrf.mxu0
      %v645 = vadd.f32 0.0, %v644
      %v646 = vpop.f32.mrf.mxu0
      %647 = vmatprep.mubr.f32.mxu0 0.0
      %648 = vmatmul.mubr.f32.gmra.mxu0 %v555
      %v649 = vpop.f32.mrf.mxu0
      %v650 = vadd.f32 0.0, %v649
      %v651 = vpop.f32.mrf.mxu0
      %652 = vmatprep.mubr.f32.mxu0 0.0
      %653 = vmatmul.mubr.f32.gmra.mxu0 %v558
      %v654 = vpop.f32.mrf.mxu0
      %v655 = vadd.f32 0.0, %v654
      %v656 = vpop.f32.mrf.mxu0
      %657 = vmatprep.mubr.f32.mxu0 0.0
      %658 = vmatmul.mubr.f32.gmra.mxu0 %v561
      %v659 = vpop.f32.mrf.mxu0
      %v660 = vadd.f32 0.0, %v659
      %v661 = vpop.f32.mrf.mxu0
      %662 = vdwg.mxu0
      %vm663 = vcmask 162816
      %664 = vst.msk [vmem:[%s197] sm:$0xff] %vm663, %v630
      %665 = vst.msk [vmem:[%s197 + $0x8] sm:$0xff] %vm663, %v635
      %666 = vst.msk [vmem:[%s197 + $0x10] sm:$0xff] %vm663, %v640
      %667 = vst.msk [vmem:[%s197 + $0x18] sm:$0xff] %vm663, %v645
      %668 = vst.msk [vmem:[%s197 + $0x20] sm:$0xff] %vm663, %v650
      %669 = vst.msk [vmem:[%s197 + $0x28] sm:$0xff] %vm663, %v655
      %vm670 = vcmask 155648
      %671 = vst.msk [vmem:[%s197 + $0x30] sm:$0x1] %vm670, %v660
      %p672 = scmp.lt.s32.totalorder %s15, 1
      %s673 = scalar_select %p672, %s15, 1
      %s674 = smul.addr %s673, 7
      %s675 = smul.addr %s674, 8
      %s676 = scalar_lea.vmem %s4, %s675
      // Predicated region
      $region37: #{cnn_v5_forward.2} parent=35 // pred_check
        %p677 = pneg %p122
      $region38: #{cnn_v5_forward.2} parent=35 // pred_check_branch
        %679 = sbr.rel (%p677) target = $region40
      $region39: #{cnn_v5_forward.2} parent=35 // pred_region
        _
      $region40: #{cnn_v5_forward.2} parent=35 // pred_fallthru
        _
    $region36: #{cnn_v5_forward.2} parent=5 // pred_fallthru
      _
    %p680 = scmp.le.s32.totalorder 2, %s10
    // Predicated region
    $region41: #{cnn_v5_forward.2} parent=5 // pred_check
      %p681 = pneg %p680
    $region42: #{cnn_v5_forward.2} parent=5 // pred_check_branch
      %683 = sbr.rel (%p681) target = $region44
    $region43: #{cnn_v5_forward.2} parent=5 // pred_region
      %s684 = ssub.s32 %s10, 2
      // Predicated region
      $region45: #{cnn_v5_forward.2} parent=43 // pred_check
        %p685 = pneg %p128
      $region46: #{cnn_v5_forward.2} parent=43 // pred_check_branch
        %687 = sbr.rel (%p685) target = $region48
      $region47: #{cnn_v5_forward.2} parent=43 // pred_region
        %p688 = scmp.lt.s32.totalorder %s16, 1
        %s689 = scalar_select %p688, %s16, 1
        %s690 = smul.addr %s689, 7
        %s691 = smul.addr %s690, 8
        %s692 = scalar_lea.vmem %s4, %s691
      $region48: #{cnn_v5_forward.2} parent=43 // pred_fallthru
        _
    $region44: #{cnn_v5_forward.2} parent=5 // pred_fallthru
      _
  $region6: #{cnn_v5_forward.2} parent=0 // loop_footer
    %s14 = sadd.s32 1, %s10
  $region7: #{cnn_v5_forward.2} parent=0 // loop_footer_branch
    %9 = sbr.rel target = $region3
  $region8: #{cnn_v5_forward.2} parent=0 // loop_exit
    _

// kernel: cnn_v5_forward.3
$region0: #{cnn_v5_forward.3}
  #allocation0 [shape = 'u32[]', space=smem, size = 0x4, offset = 0x4, fixed_abs, tag = 'smem constant byte address 0x4 - core index']
  #allocation1 [shape = 'u32[144,128]{1,0:T(1,128)}', space=vmem, size = 0x12000, scoped, tag = 'internal scratch']
  %s0 = inlined_call_operand.vmem [shape: f32[2,980], index: 0, kind: input, shape index: {}]
  %s1 = inlined_call_operand.vmem [shape: f32[980,10], index: 1, kind: input, shape index: {}]
  %s2 = inlined_call_operand.vmem [shape: f32[1,10], index: 2, kind: input, shape index: {}]
  %s3 = inlined_call_operand.hbm [shape: f32[2,10], index: 3, kind: output, shape index: {}]
  %s4 = sld [smem:[#allocation0]]
  $region22: #{cnn_v5_forward.3} parent=0
    _
  %s6 = ssub.s32 1, %s4
  %s7 = scalar_select 0, %s6, %s4
  $region1: #{cnn_v5_forward.3} parent=0
    #allocation2 [shape = 'u8[1024]{0}', space=vmem, size = 0x400, scoped, tag = 'output window, operand 0, single buffered']
    #allocation3 [shape = 's32[1]{0}', space=sflag, size = 0x4, scoped, tag = 'scoped memory for cnn_v5_forward.3']
    %8 = vsyncpa [#allocation3], 0
    // Predicated region
    $region2: #{cnn_v5_forward.3} parent=1 // pred_check
      _
    $region3: #{cnn_v5_forward.3} parent=1 // pred_check_branch
      %10 = sbr.rel (0) target = $region5
    $region4: #{cnn_v5_forward.3} parent=1 // pred_region
      _
    $region5: #{cnn_v5_forward.3} parent=1 // pred_fallthru
      _
    // Predicated region
    $region6: #{cnn_v5_forward.3} parent=1 // pred_check
      _
    $region7: #{cnn_v5_forward.3} parent=1 // pred_check_branch
      %12 = sbr.rel (0) target = $region9
    $region8: #{cnn_v5_forward.3} parent=1 // pred_region
      _
    $region9: #{cnn_v5_forward.3} parent=1 // pred_fallthru
      _
    // Predicated region
    $region10: #{cnn_v5_forward.3} parent=1 // pred_check
      _
    $region11: #{cnn_v5_forward.3} parent=1 // pred_check_branch
      %14 = sbr.rel (0) target = $region13
    $region12: #{cnn_v5_forward.3} parent=1 // pred_region
      _
    $region13: #{cnn_v5_forward.3} parent=1 // pred_fallthru
      _
    %v15 = vld [vmem:[%s0] sm:$0xff]
    %v16 = vld [vmem:[%s0 + $0x8] sm:$0xff]
    %v17 = vld [vmem:[%s1] sm:$0xff]
    %v18 = vld [vmem:[%s1 + $0x8] sm:$0xff]
    %v19 = vld [vmem:[%s1 + $0x10] sm:$0xff]
    %v20 = vld [vmem:[%s1 + $0x18] sm:$0xff]
    %v21 = vld [vmem:[%s1 + $0x20] sm:$0xff]
    %v22 = vld [vmem:[%s1 + $0x28] sm:$0xff]
    %v23 = vld [vmem:[%s1 + $0x30] sm:$0xff]
    %v24 = vld [vmem:[%s1 + $0x38] sm:$0xff]
    %v25 = vld [vmem:[%s1 + $0x40] sm:$0xff]
    %v26 = vld [vmem:[%s1 + $0x48] sm:$0xff]
    %v27 = vld [vmem:[%s1 + $0x50] sm:$0xff]
    %v28 = vld [vmem:[%s1 + $0x58] sm:$0xff]
    %v29 = vld [vmem:[%s1 + $0x60] sm:$0xff]
    %v30 = vld [vmem:[%s1 + $0x68] sm:$0xff]
    %v31 = vld [vmem:[%s1 + $0x70] sm:$0xff]
    %v32 = vld [vmem:[%s1 + $0x78] sm:$0xff]
    %v33 = vld [vmem:[%s1 + $0x80] sm:$0xff]
    %v34 = vld [vmem:[%s1 + $0x88] sm:$0xff]
    %v35 = vld [vmem:[%s1 + $0x90] sm:$0xff]
    %v36 = vld [vmem:[%s1 + $0x98] sm:$0xff]
    %v37 = vld [vmem:[%s1 + $0xa0] sm:$0xff]
    %v38 = vld [vmem:[%s1 + $0xa8] sm:$0xff]
    %v39 = vld [vmem:[%s1 + $0xb0] sm:$0xff]
    %v40 = vld [vmem:[%s1 + $0xb8] sm:$0xff]
    %v41 = vld [vmem:[%s1 + $0xc0] sm:$0xff]
    %v42 = vld [vmem:[%s1 + $0xc8] sm:$0xff]
    %v43 = vld [vmem:[%s1 + $0xd0] sm:$0xff]
    %v44 = vld [vmem:[%s1 + $0xd8] sm:$0xff]
    %v45 = vld [vmem:[%s1 + $0xe0] sm:$0xff]
    %v46 = vld [vmem:[%s1 + $0xe8] sm:$0xff]
    %v47 = vld [vmem:[%s1 + $0xf0] sm:$0xff]
    %v48 = vld [vmem:[%s1 + $0xf8] sm:$0xff]
    %v49 = vld [vmem:[%s1 + $0x100] sm:$0xff]
    %v50 = vld [vmem:[%s1 + $0x108] sm:$0xff]
    %v51 = vld [vmem:[%s1 + $0x110] sm:$0xff]
    %v52 = vld [vmem:[%s1 + $0x118] sm:$0xff]
    %v53 = vld [vmem:[%s1 + $0x120] sm:$0xff]
    %v54 = vld [vmem:[%s1 + $0x128] sm:$0xff]
    %v55 = vld [vmem:[%s1 + $0x130] sm:$0xff]
    %v56 = vld [vmem:[%s1 + $0x138] sm:$0xff]
    %v57 = vld [vmem:[%s1 + $0x140] sm:$0xff]
    %v58 = vld [vmem:[%s1 + $0x148] sm:$0xff]
    %v59 = vld [vmem:[%s1 + $0x150] sm:$0xff]
    %v60 = vld [vmem:[%s1 + $0x158] sm:$0xff]
    %v61 = vld [vmem:[%s1 + $0x160] sm:$0xff]
    %v62 = vld [vmem:[%s1 + $0x168] sm:$0xff]
    %v63 = vld [vmem:[%s1 + $0x170] sm:$0xff]
    %v64 = vld [vmem:[%s1 + $0x178] sm:$0xff]
    %v65 = vld [vmem:[%s1 + $0x180] sm:$0xff]
    %v66 = vld [vmem:[%s1 + $0x188] sm:$0xff]
    %v67 = vld [vmem:[%s1 + $0x190] sm:$0xff]
    %v68 = vld [vmem:[%s1 + $0x198] sm:$0xff]
    %v69 = vld [vmem:[%s1 + $0x1a0] sm:$0xff]
    %v70 = vld [vmem:[%s1 + $0x1a8] sm:$0xff]
    %v71 = vld [vmem:[%s1 + $0x1b0] sm:$0xff]
    %v72 = vld [vmem:[%s1 + $0x1b8] sm:$0xff]
    %v73 = vld [vmem:[%s1 + $0x1c0] sm:$0xff]
    %v74 = vld [vmem:[%s1 + $0x1c8] sm:$0xff]
    %v75 = vld [vmem:[%s1 + $0x1d0] sm:$0xff]
    %v76 = vld [vmem:[%s1 + $0x1d8] sm:$0xff]
    %v77 = vld [vmem:[%s1 + $0x1e0] sm:$0xff]
    %v78 = vld [vmem:[%s1 + $0x1e8] sm:$0xff]
    %v79 = vld [vmem:[%s1 + $0x1f0] sm:$0xff]
    %v80 = vld [vmem:[%s1 + $0x1f8] sm:$0xff]
    %v81 = vld [vmem:[%s1 + $0x200] sm:$0xff]
    %v82 = vld [vmem:[%s1 + $0x208] sm:$0xff]
    %v83 = vld [vmem:[%s1 + $0x210] sm:$0xff]
    %v84 = vld [vmem:[%s1 + $0x218] sm:$0xff]
    %v85 = vld [vmem:[%s1 + $0x220] sm:$0xff]
    %v86 = vld [vmem:[%s1 + $0x228] sm:$0xff]
    %v87 = vld [vmem:[%s1 + $0x230] sm:$0xff]
    %v88 = vld [vmem:[%s1 + $0x238] sm:$0xff]
    %v89 = vld [vmem:[%s1 + $0x240] sm:$0xff]
    %v90 = vld [vmem:[%s1 + $0x248] sm:$0xff]
    %v91 = vld [vmem:[%s1 + $0x250] sm:$0xff]
    %v92 = vld [vmem:[%s1 + $0x258] sm:$0xff]
    %v93 = vld [vmem:[%s1 + $0x260] sm:$0xff]
    %v94 = vld [vmem:[%s1 + $0x268] sm:$0xff]
    %v95 = vld [vmem:[%s1 + $0x270] sm:$0xff]
    %v96 = vld [vmem:[%s1 + $0x278] sm:$0xff]
    %v97 = vld [vmem:[%s1 + $0x280] sm:$0xff]
    %v98 = vld [vmem:[%s1 + $0x288] sm:$0xff]
    %v99 = vld [vmem:[%s1 + $0x290] sm:$0xff]
    %v100 = vld [vmem:[%s1 + $0x298] sm:$0xff]
    %v101 = vld [vmem:[%s1 + $0x2a0] sm:$0xff]
    %v102 = vld [vmem:[%s1 + $0x2a8] sm:$0xff]
    %v103 = vld [vmem:[%s1 + $0x2b0] sm:$0xff]
    %v104 = vld [vmem:[%s1 + $0x2b8] sm:$0xff]
    %v105 = vld [vmem:[%s1 + $0x2c0] sm:$0xff]
    %v106 = vld [vmem:[%s1 + $0x2c8] sm:$0xff]
    %v107 = vld [vmem:[%s1 + $0x2d0] sm:$0xff]
    %v108 = vld [vmem:[%s1 + $0x2d8] sm:$0xff]
    %v109 = vld [vmem:[%s1 + $0x2e0] sm:$0xff]
    %v110 = vld [vmem:[%s1 + $0x2e8] sm:$0xff]
    %v111 = vld [vmem:[%s1 + $0x2f0] sm:$0xff]
    %v112 = vld [vmem:[%s1 + $0x2f8] sm:$0xff]
    %v113 = vld [vmem:[%s1 + $0x300] sm:$0xff]
    %v114 = vld [vmem:[%s1 + $0x308] sm:$0xff]
    %v115 = vld [vmem:[%s1 + $0x310] sm:$0xff]
    %v116 = vld [vmem:[%s1 + $0x318] sm:$0xff]
    %v117 = vld [vmem:[%s1 + $0x320] sm:$0xff]
    %v118 = vld [vmem:[%s1 + $0x328] sm:$0xff]
    %v119 = vld [vmem:[%s1 + $0x330] sm:$0xff]
    %v120 = vld [vmem:[%s1 + $0x338] sm:$0xff]
    %v121 = vld [vmem:[%s1 + $0x340] sm:$0xff]
    %v122 = vld [vmem:[%s1 + $0x348] sm:$0xff]
    %v123 = vld [vmem:[%s1 + $0x350] sm:$0xff]
    %v124 = vld [vmem:[%s1 + $0x358] sm:$0xff]
    %v125 = vld [vmem:[%s1 + $0x360] sm:$0xff]
    %v126 = vld [vmem:[%s1 + $0x368] sm:$0xff]
    %v127 = vld [vmem:[%s1 + $0x370] sm:$0xff]
    %v128 = vld [vmem:[%s1 + $0x378] sm:$0xff]
    %v129 = vld [vmem:[%s1 + $0x380] sm:$0xff]
    %v130 = vld [vmem:[%s1 + $0x388] sm:$0xff]
    %v131 = vld [vmem:[%s1 + $0x390] sm:$0xff]
    %v132 = vld [vmem:[%s1 + $0x398] sm:$0xff]
    %v133 = vld [vmem:[%s1 + $0x3a0] sm:$0xff]
    %v134 = vld [vmem:[%s1 + $0x3a8] sm:$0xff]
    %v135 = vld [vmem:[%s1 + $0x3b0] sm:$0xff]
    %v136 = vld [vmem:[%s1 + $0x3b8] sm:$0xff]
    %v137 = vld [vmem:[%s1 + $0x3c0] sm:$0xff]
    %v138 = vld [vmem:[%s1 + $0x3c8] sm:$0xff]
    %v139 = vld [vmem:[%s1 + $0x3d0] sm:$0xf]
    %v140 = vld [vmem:[%s2] sm:$0x1]
    %v142 = vlaneseq
    %v143 = vshrl.u32 %v142, 7
    %v144 = vsub.s32 0, %v143
    %v145 = vrot.slane %v140, %v144
    %v149 = vcombine.high %v15, %v15
    %v151 = vunpack.c.l.s4 1983009808
    %v152 = vunpack.c.0.s8 %v151
    %v153 = vlaneseq
    %v154 = vshrl.u32 %v153, 7
    %v155 = vsub.s32 %v152, %v154
    %v156 = vrot.slane %v15, %v155
    %v158 = vunpack.c.l.s4 1983009808
    %v159 = vunpack.c.0.s8 %v158
    %v160 = vlaneseq
    %v161 = vshrl.u32 %v160, 7
    %v162 = vsub.s32 %v159, %v161
    %v163 = vrot.slane %v149, %v162
    %v164 = vcombine.high %v156, %v156
    %v165 = vcombine.high %v163, %v163
    %v166 = vcombine.high %v16, %v16
    %v168 = vunpack.c.l.s4 1983009808
    %v169 = vunpack.c.0.s8 %v168
    %v170 = vlaneseq
    %v171 = vshrl.u32 %v170, 7
    %v172 = vsub.s32 %v169, %v171
    %v173 = vrot.slane %v16, %v172
    %v175 = vunpack.c.l.s4 1983009808
    %v176 = vunpack.c.0.s8 %v175
    %v177 = vlaneseq
    %v178 = vshrl.u32 %v177, 7
    %v179 = vsub.s32 %v176, %v178
    %v180 = vrot.slane %v166, %v179
    %v181 = vcombine.high %v173, %v173
    %v182 = vcombine.high %v180, %v180
    %vm190 = vcmask 687104
    %v191 = vsel %vm190, %v182, 0
    %vm193 = vcmask 1043456
    %v195 = vsel %vm193, %v139, 0
    %197 = vmatprep.subr.mxu0 0.0
    %198 = vmatpush1.msra.mxu0 %v32
    %199 = vmatprep.subr.mxu0 0.0
    %200 = vmatpush1.msra.mxu0 %v31
    %201 = vmatprep.subr.mxu0 0.0
    %202 = vmatpush1.msra.mxu0 %v30
    %203 = vmatprep.subr.mxu0 0.0
    %204 = vmatpush1.msra.mxu0 %v29
    %205 = vmatprep.subr.mxu0 0.0
    %206 = vmatpush1.msra.mxu0 %v28
    %207 = vmatprep.subr.mxu0 0.0
    %208 = vmatpush1.msra.mxu0 %v27
    %209 = vmatprep.subr.mxu0 0.0
    %210 = vmatpush1.msra.mxu0 %v26
    %211 = vmatprep.subr.mxu0 0.0
    %212 = vmatpush1.msra.mxu0 %v25
    %213 = vmatprep.subr.mxu0 0.0
    %214 = vmatpush1.msra.mxu0 %v24
    %215 = vmatprep.subr.mxu0 0.0
    %216 = vmatpush1.msra.mxu0 %v23
    %217 = vmatprep.subr.mxu0 0.0
    %218 = vmatpush1.msra.mxu0 %v22
    %219 = vmatprep.subr.mxu0 0.0
    %220 = vmatpush1.msra.mxu0 %v21
    %221 = vmatprep.subr.mxu0 0.0
    %222 = vmatpush1.msra.mxu0 %v20
    %223 = vmatprep.subr.mxu0 0.0
    %224 = vmatpush1.msra.mxu0 %v19
    %225 = vmatprep.subr.mxu0 0.0
    %226 = vmatpush1.msra.mxu0 %v18
    %227 = vmatprep.subr.mxu0 0.0
    %228 = vmatpush1.msra.mxu0 %v17
    %229 = vmatprep.subr.mxu0 0.0
    %230 = vmatpush2.msra.mxu0 %v48
    %231 = vmatprep.subr.mxu0 0.0
    %232 = vmatpush2.msra.mxu0 %v47
    %233 = vmatprep.subr.mxu0 0.0
    %234 = vmatpush2.msra.mxu0 %v46
    %235 = vmatprep.subr.mxu0 0.0
    %236 = vmatpush2.msra.mxu0 %v45
    %237 = vmatprep.subr.mxu0 0.0
    %238 = vmatpush2.msra.mxu0 %v44
    %239 = vmatprep.subr.mxu0 0.0
    %240 = vmatpush2.msra.mxu0 %v43
    %241 = vmatprep.subr.mxu0 0.0
    %242 = vmatpush2.msra.mxu0 %v42
    %243 = vmatprep.subr.mxu0 0.0
    %244 = vmatpush2.msra.mxu0 %v41
    %245 = vmatprep.subr.mxu0 0.0
    %246 = vmatpush2.msra.mxu0 %v40
    %247 = vmatprep.subr.mxu0 0.0
    %248 = vmatpush2.msra.mxu0 %v39
    %249 = vmatprep.subr.mxu0 0.0
    %250 = vmatpush2.msra.mxu0 %v38
    %251 = vmatprep.subr.mxu0 0.0
    %252 = vmatpush2.msra.mxu0 %v37
    %253 = vmatprep.subr.mxu0 0.0
    %254 = vmatpush2.msra.mxu0 %v36
    %255 = vmatprep.subr.mxu0 0.0
    %256 = vmatpush2.msra.mxu0 %v35
    %257 = vmatprep.subr.mxu0 0.0
    %258 = vmatpush2.msra.mxu0 %v34
    %259 = vmatprep.subr.mxu0 0.0
    %260 = vmatpush2.msra.mxu0 %v33
    %261 = vmatprep.mubr.f32.mxu0 %v164
    %262 = vmatmul.mubr.f32.gmra.mxu0 %v156
    %v263 = vpop.f32.mrf.mxu0
    %v264 = vadd.f32 %v145, %v263
    %v265 = vpop.f32.mrf.mxu0
    %266 = vdwg.mxu0
    %267 = vmatprep.subr.mxu0 0.0
    %268 = vmatpush1.msra.mxu0 %v64
    %269 = vmatprep.subr.mxu0 0.0
    %270 = vmatpush1.msra.mxu0 %v63
    %271 = vmatprep.subr.mxu0 0.0
    %272 = vmatpush1.msra.mxu0 %v62
    %273 = vmatprep.subr.mxu0 0.0
    %274 = vmatpush1.msra.mxu0 %v61
    %275 = vmatprep.subr.mxu0 0.0
    %276 = vmatpush1.msra.mxu0 %v60
    %277 = vmatprep.subr.mxu0 0.0
    %278 = vmatpush1.msra.mxu0 %v59
    %279 = vmatprep.subr.mxu0 0.0
    %280 = vmatpush1.msra.mxu0 %v58
    %281 = vmatprep.subr.mxu0 0.0
    %282 = vmatpush1.msra.mxu0 %v57
    %283 = vmatprep.subr.mxu0 0.0
    %284 = vmatpush1.msra.mxu0 %v56
    %285 = vmatprep.subr.mxu0 0.0
    %286 = vmatpush1.msra.mxu0 %v55
    %287 = vmatprep.subr.mxu0 0.0
    %288 = vmatpush1.msra.mxu0 %v54
    %289 = vmatprep.subr.mxu0 0.0
    %290 = vmatpush1.msra.mxu0 %v53
    %291 = vmatprep.subr.mxu0 0.0
    %292 = vmatpush1.msra.mxu0 %v52
    %293 = vmatprep.subr.mxu0 0.0
    %294 = vmatpush1.msra.mxu0 %v51
    %295 = vmatprep.subr.mxu0 0.0
    %296 = vmatpush1.msra.mxu0 %v50
    %297 = vmatprep.subr.mxu0 0.0
    %298 = vmatpush1.msra.mxu0 %v49
    %299 = vmatprep.subr.mxu0 0.0
    %300 = vmatpush2.msra.mxu0 %v80
    %301 = vmatprep.subr.mxu0 0.0
    %302 = vmatpush2.msra.mxu0 %v79
    %303 = vmatprep.subr.mxu0 0.0
    %304 = vmatpush2.msra.mxu0 %v78
    %305 = vmatprep.subr.mxu0 0.0
    %306 = vmatpush2.msra.mxu0 %v77
    %307 = vmatprep.subr.mxu0 0.0
    %308 = vmatpush2.msra.mxu0 %v76
    %309 = vmatprep.subr.mxu0 0.0
    %310 = vmatpush2.msra.mxu0 %v75
    %311 = vmatprep.subr.mxu0 0.0
    %312 = vmatpush2.msra.mxu0 %v74
    %313 = vmatprep.subr.mxu0 0.0
    %314 = vmatpush2.msra.mxu0 %v73
    %315 = vmatprep.subr.mxu0 0.0
    %316 = vmatpush2.msra.mxu0 %v72
    %317 = vmatprep.subr.mxu0 0.0
    %318 = vmatpush2.msra.mxu0 %v71
    %319 = vmatprep.subr.mxu0 0.0
    %320 = vmatpush2.msra.mxu0 %v70
    %321 = vmatprep.subr.mxu0 0.0
    %322 = vmatpush2.msra.mxu0 %v69
    %323 = vmatprep.subr.mxu0 0.0
    %324 = vmatpush2.msra.mxu0 %v68
    %325 = vmatprep.subr.mxu0 0.0
    %326 = vmatpush2.msra.mxu0 %v67
    %327 = vmatprep.subr.mxu0 0.0
    %328 = vmatpush2.msra.mxu0 %v66
    %329 = vmatprep.subr.mxu0 0.0
    %330 = vmatpush2.msra.mxu0 %v65
    %331 = vmatprep.mubr.f32.mxu0 %v165
    %332 = vmatmul.mubr.f32.gmra.mxu0 %v163
    %v333 = vpop.f32.mrf.mxu0
    %v334 = vadd.f32 %v264, %v333
    %v335 = vpop.f32.mrf.mxu0
    %336 = vdwg.mxu0
    %337 = vmatprep.subr.mxu0 0.0
    %338 = vmatpush1.msra.mxu0 %v96
    %339 = vmatprep.subr.mxu0 0.0
    %340 = vmatpush1.msra.mxu0 %v95
    %341 = vmatprep.subr.mxu0 0.0
    %342 = vmatpush1.msra.mxu0 %v94
    %343 = vmatprep.subr.mxu0 0.0
    %344 = vmatpush1.msra.mxu0 %v93
    %345 = vmatprep.subr.mxu0 0.0
    %346 = vmatpush1.msra.mxu0 %v92
    %347 = vmatprep.subr.mxu0 0.0
    %348 = vmatpush1.msra.mxu0 %v91
    %349 = vmatprep.subr.mxu0 0.0
    %350 = vmatpush1.msra.mxu0 %v90
    %351 = vmatprep.subr.mxu0 0.0
    %352 = vmatpush1.msra.mxu0 %v89
    %353 = vmatprep.subr.mxu0 0.0
    %354 = vmatpush1.msra.mxu0 %v88
    %355 = vmatprep.subr.mxu0 0.0
    %356 = vmatpush1.msra.mxu0 %v87
    %357 = vmatprep.subr.mxu0 0.0
    %358 = vmatpush1.msra.mxu0 %v86
    %359 = vmatprep.subr.mxu0 0.0
    %360 = vmatpush1.msra.mxu0 %v85
    %361 = vmatprep.subr.mxu0 0.0
    %362 = vmatpush1.msra.mxu0 %v84
    %363 = vmatprep.subr.mxu0 0.0
    %364 = vmatpush1.msra.mxu0 %v83
    %365 = vmatprep.subr.mxu0 0.0
    %366 = vmatpush1.msra.mxu0 %v82
    %367 = vmatprep.subr.mxu0 0.0
    %368 = vmatpush1.msra.mxu0 %v81
    %369 = vmatprep.subr.mxu0 0.0
    %370 = vmatpush2.msra.mxu0 %v112
    %371 = vmatprep.subr.mxu0 0.0
    %372 = vmatpush2.msra.mxu0 %v111
    %373 = vmatprep.subr.mxu0 0.0
    %374 = vmatpush2.msra.mxu0 %v110
    %375 = vmatprep.subr.mxu0 0.0
    %376 = vmatpush2.msra.mxu0 %v109
    %377 = vmatprep.subr.mxu0 0.0
    %378 = vmatpush2.msra.mxu0 %v108
    %379 = vmatprep.subr.mxu0 0.0
    %380 = vmatpush2.msra.mxu0 %v107
    %381 = vmatprep.subr.mxu0 0.0
    %382 = vmatpush2.msra.mxu0 %v106
    %383 = vmatprep.subr.mxu0 0.0
    %384 = vmatpush2.msra.mxu0 %v105
    %385 = vmatprep.subr.mxu0 0.0
    %386 = vmatpush2.msra.mxu0 %v104
    %387 = vmatprep.subr.mxu0 0.0
    %388 = vmatpush2.msra.mxu0 %v103
    %389 = vmatprep.subr.mxu0 0.0
    %390 = vmatpush2.msra.mxu0 %v102
    %391 = vmatprep.subr.mxu0 0.0
    %392 = vmatpush2.msra.mxu0 %v101
    %393 = vmatprep.subr.mxu0 0.0
    %394 = vmatpush2.msra.mxu0 %v100
    %395 = vmatprep.subr.mxu0 0.0
    %396 = vmatpush2.msra.mxu0 %v99
    %397 = vmatprep.subr.mxu0 0.0
    %398 = vmatpush2.msra.mxu0 %v98
    %399 = vmatprep.subr.mxu0 0.0
    %400 = vmatpush2.msra.mxu0 %v97
    %401 = vmatprep.mubr.f32.mxu0 %v181
    %402 = vmatmul.mubr.f32.gmra.mxu0 %v173
    %v403 = vpop.f32.mrf.mxu0
    %v404 = vadd.f32 %v334, %v403
    %v405 = vpop.f32.mrf.mxu0
    %406 = vdwg.mxu0
    %407 = vmatprep.subr.mxu0 0.0
    %408 = vmatpush1.msra.mxu0 %v128
    %409 = vmatprep.subr.mxu0 0.0
    %410 = vmatpush1.msra.mxu0 %v127
    %411 = vmatprep.subr.mxu0 0.0
    %412 = vmatpush1.msra.mxu0 %v126
    %413 = vmatprep.subr.mxu0 0.0
    %414 = vmatpush1.msra.mxu0 %v125
    %415 = vmatprep.subr.mxu0 0.0
    %416 = vmatpush1.msra.mxu0 %v124
    %417 = vmatprep.subr.mxu0 0.0
    %418 = vmatpush1.msra.mxu0 %v123
    %419 = vmatprep.subr.mxu0 0.0
    %420 = vmatpush1.msra.mxu0 %v122
    %421 = vmatprep.subr.mxu0 0.0
    %422 = vmatpush1.msra.mxu0 %v121
    %423 = vmatprep.subr.mxu0 0.0
    %424 = vmatpush1.msra.mxu0 %v120
    %425 = vmatprep.subr.mxu0 0.0
    %426 = vmatpush1.msra.mxu0 %v119
    %427 = vmatprep.subr.mxu0 0.0
    %428 = vmatpush1.msra.mxu0 %v118
    %429 = vmatprep.subr.mxu0 0.0
    %430 = vmatpush1.msra.mxu0 %v117
    %431 = vmatprep.subr.mxu0 0.0
    %432 = vmatpush1.msra.mxu0 %v116
    %433 = vmatprep.subr.mxu0 0.0
    %434 = vmatpush1.msra.mxu0 %v115
    %435 = vmatprep.subr.mxu0 0.0
    %436 = vmatpush1.msra.mxu0 %v114
    %437 = vmatprep.subr.mxu0 0.0
    %438 = vmatpush1.msra.mxu0 %v113
    %439 = vmatprep.subr.mxu0 0.0
    %440 = vmatpush2.msra.mxu0 0.0
    %441 = vmatprep.subr.mxu0 0.0
    %442 = vmatpush2.msra.mxu0 0.0
    %443 = vmatprep.subr.mxu0 0.0
    %444 = vmatpush2.msra.mxu0 0.0
    %445 = vmatprep.subr.mxu0 0.0
    %446 = vmatpush2.msra.mxu0 0.0
    %447 = vmatprep.subr.mxu0 0.0
    %448 = vmatpush2.msra.mxu0 0.0
    %449 = vmatprep.subr.mxu0 0.0
    %450 = vmatpush2.msra.mxu0 %v195
    %451 = vmatprep.subr.mxu0 0.0
    %452 = vmatpush2.msra.mxu0 %v138
    %453 = vmatprep.subr.mxu0 0.0
    %454 = vmatpush2.msra.mxu0 %v137
    %455 = vmatprep.subr.mxu0 0.0
    %456 = vmatpush2.msra.mxu0 %v136
    %457 = vmatprep.subr.mxu0 0.0
    %458 = vmatpush2.msra.mxu0 %v135
    %459 = vmatprep.subr.mxu0 0.0
    %460 = vmatpush2.msra.mxu0 %v134
    %461 = vmatprep.subr.mxu0 0.0
    %462 = vmatpush2.msra.mxu0 %v133
    %463 = vmatprep.subr.mxu0 0.0
    %464 = vmatpush2.msra.mxu0 %v132
    %465 = vmatprep.subr.mxu0 0.0
    %466 = vmatpush2.msra.mxu0 %v131
    %467 = vmatprep.subr.mxu0 0.0
    %468 = vmatpush2.msra.mxu0 %v130
    %469 = vmatprep.subr.mxu0 0.0
    %470 = vmatpush2.msra.mxu0 %v129
    %471 = vmatprep.mubr.f32.mxu0 %v191
    %472 = vmatmul.mubr.f32.gmra.mxu0 %v180
    %v473 = vpop.f32.mrf.mxu0
    %v474 = vadd.f32 %v404, %v473
    %v475 = vpop.f32.mrf.mxu0
    %476 = vdwg.mxu0
    %vm477 = vcmask 74752
    %v478 = vsel %vm477, %v474, -inf
    %479 = vmax.xlane.f32.xlu0 %v478
    %v480 = vpop.xlane.xlu0 %479
    %v481 = vsub.f32 %v474, %v480
    %v482 = vmul.f32 %v481, 1.442695
    %v483 = vpow.pop %v482
    %v484 = vsel %vm477, %v483, 0.0
    %485 = vadd.xlane.f32.xlu0 %v484
    %v486 = vpop.xlane.xlu0 %485
    %v487 = vlog2.pop %v486
    %v488 = vmul.f32 %v487, 0.6931472
    %v489 = vsub.f32 %v481, %v488
    %490 = vst.msk [vmem:[#allocation2] sm:$0x3] %vm477, %v489
    // Predicated region
    $region14: #{cnn_v5_forward.3} parent=1 // pred_check
      _
    $region15: #{cnn_v5_forward.3} parent=1 // pred_check_branch
      %492 = sbr.rel (0) target = $region17
    $region16: #{cnn_v5_forward.3} parent=1 // pred_region
      %s494 = ssub.s32 32, 32
      %495 = vsyncadd [#allocation3], %s494
      %s497 = sshll.u32 [#allocation2], 4
      %s498 = int_to_ptr.vmem [resolvable:$true] %s497
      %500 = dma.vmem_to_hbm [thread:$0]  %s498, 32, %s3, [#allocation3]
    $region17: #{cnn_v5_forward.3} parent=1 // pred_fallthru
      _
    // Predicated region
    $region18: #{cnn_v5_forward.3} parent=1 // pred_check
      _
    $region19: #{cnn_v5_forward.3} parent=1 // pred_check_branch
      %502 = sbr.rel (0) target = $region21
    $region20: #{cnn_v5_forward.3} parent=1 // pred_region
      %503 = dma.done [#allocation3], 32
    $region21: #{cnn_v5_forward.3} parent=1 // pred_fallthru
      _
    %504 = vsyncpa [#allocation3], 1

</llo_original>
